<compile_context>
chip_gen: v5e
topology: v5e:2x2
jax: 0.10.0
libtpu: 0.0.40
codegen_flags: <defaults>
</compile_context>

<pallas_src>
import functools
import math

import jax
import jax.numpy as jnp
from jax import lax
from jax.experimental import pallas as pl
from jax.experimental.pallas import tpu as pltpu


def gauge_attn_kernel(xq_ref, xkv_ref, theta_ref,
                      wg_ref, bg_ref,
                      wq_ref, wk_ref, wv_ref,
                      bq_ref, bk_ref, bv_ref,
                      wp_ref, bp_ref,
                      o_ref,
                      acc_ref,
                      *, num_heads, head_dim):
    """One (batch, query-row-tile) per grid step.

    Gauge transform, per-head QKV projection, softmax attention and the output
    projection all run in-kernel; dropout is identity (eval mode)."""
    theta = theta_ref[...]                        # (1, C) == 0.1 * gauge_theta, f32

    def gauged(x):
        # x_gauge = gauge_transform(x) * gauge_theta ; x + 0.1 * x_gauge
        # (the 0.1 is folded into theta by the wrapper).  MXU accumulates in f32.
        g = jnp.dot(x, wg_ref[...], preferred_element_type=jnp.float32) + bg_ref[...]
        return x.astype(jnp.float32) + g * theta

    xq = gauged(xq_ref[...])                      # (block_q, C) f32  (query rows)
    xkv = gauged(xkv_ref[...])                    # (N, C)       f32  (key/value rows)

    acc_ref[...] = jnp.zeros_like(acc_ref)        # per-step projection accumulator

    scale = 1.0 / math.sqrt(head_dim)
    w_dt = wq_ref.dtype

    def head_body(h, carry):
        # Per-head projections: slice the *weight refs* on their leading (head)
        # axis -- no lane-offset slicing of live values, K = C stays MXU-wide.
        q_h = (jnp.dot(xq.astype(w_dt), wq_ref[h],
                       preferred_element_type=jnp.float32) + bq_ref[h])   # (bq, D)
        k_h = (jnp.dot(xkv.astype(w_dt), wk_ref[h],
                       preferred_element_type=jnp.float32) + bk_ref[h])   # (N, D)
        v_h = (jnp.dot(xkv.astype(w_dt), wv_ref[h],
                       preferred_element_type=jnp.float32) + bv_ref[h])   # (N, D)

        # Scores: contract the last dims directly (no k_h.T / XLU transpose).
        s = lax.dot_general(q_h, k_h, (((1,), (1,)), ((), ())),
                            preferred_element_type=jnp.float32) * scale   # (bq, N)
        s = s - jnp.max(s, axis=-1, keepdims=True)
        p = jnp.exp(s)
        p = p * pl.reciprocal(jnp.sum(p, axis=-1, keepdims=True), approx=True)

        pv = jnp.dot(p.astype(v_h.dtype), v_h,
                     preferred_element_type=jnp.float32)                  # (bq, D)
        # Fold this head straight into the output projection: full-C lane-dense
        # accumulation, no attn_acc scratch, no masked partial-lane stores.
        acc_ref[...] += jnp.dot(pv.astype(wp_ref.dtype), wp_ref[h],
                                preferred_element_type=jnp.float32)
        return carry

    lax.fori_loop(0, num_heads, head_body, 0)

    o_ref[...] = (acc_ref[...] + bp_ref[...]).astype(o_ref.dtype)


def _const_index_map(ndim):
    def imap(b, qi):
        return (0,) * ndim
    return imap


def gauge_equivariant_attention(x, gauge_theta, params, *, num_heads, block_q=256):
    """x: (B, N, C), gauge_theta: (C,).  params: dict of pre-transposed
    weights/biases ((in, out) layout).  Returns (B, N, C)."""
    B, N, C = x.shape
    assert C % num_heads == 0, "hidden_dim must be divisible by num_heads"
    head_dim = C // num_heads
    block_q = min(block_q, N)
    # TODO(synk): handle ragged N with a masked final tile instead of asserting.
    assert N % block_q == 0, "sequence length must be divisible by the query tile"
    num_q_tiles = N // block_q

    f32 = jnp.float32
    theta_2d = (0.1 * gauge_theta.astype(f32)).reshape(1, C)
    wg = params["wg"]
    bg = params["bg"].reshape(1, C)
    # qkv weight (C, 3C) -> per-(q|k|v), per-head (H, C, D) slabs so the kernel
    # indexes heads on a leading ref axis (one-time host-side layout move).
    wqkv_r = params["wqkv"].reshape(C, 3, num_heads, head_dim).transpose(1, 2, 0, 3)
    wq_all, wk_all, wv_all = wqkv_r[0], wqkv_r[1], wqkv_r[2]
    bqkv_r = params["bqkv"].reshape(3, num_heads, 1, head_dim)
    bq_all, bk_all, bv_all = bqkv_r[0], bqkv_r[1], bqkv_r[2]
    wp_h = params["wp"].reshape(num_heads, head_dim, C)          # (H, D, C)
    bp = params["bp"].reshape(1, C)

    weights = (theta_2d, wg, bg, wq_all, wk_all, wv_all,
               bq_all, bk_all, bv_all, wp_h, bp)

    # vmem_limit_bytes sized from the actual resident buffers (review item),
    # with headroom; floored at 32 MiB, capped at 128 MiB.
    itemsize = x.dtype.itemsize
    weight_bytes = sum(int(w.size) * w.dtype.itemsize for w in weights)
    io_bytes = (block_q * C + N * C + block_q * C) * itemsize       # xq, xkv, out blocks
    working_bytes = 4 * (block_q * C + N * C                        # gauged xq / xkv (f32)
                         + block_q * N                              # one head's scores
                         + (block_q + 2 * N) * head_dim             # q_h / k_h / v_h
                         + 2 * block_q * C)                         # acc scratch + head proj
    vmem_limit = 2 * (weight_bytes + io_bytes) + 2 * working_bytes + (8 << 20)
    vmem_limit = int(min(128 << 20, max(32 << 20, vmem_limit)))

    kernel = functools.partial(gauge_attn_kernel,
                               num_heads=num_heads, head_dim=head_dim)

    in_specs = [
        # query-row tile of x: batch squeezed, kernel sees (block_q, C)
        pl.BlockSpec((None, block_q, C), lambda b, qi: (b, qi, 0)),
        # full-sequence x for the K/V side: constant across query tiles (no re-DMA)
        pl.BlockSpec((None, N, C), lambda b, qi: (b, 0, 0)),
    ] + [pl.BlockSpec(w.shape, _const_index_map(w.ndim)) for w in weights]

    return pl.pallas_call(
        kernel,
        out_shape=jax.ShapeDtypeStruct((B, N, C), x.dtype),
        grid_spec=pltpu.PrefetchScalarGridSpec(
            num_scalar_prefetch=0,
            grid=(B, num_q_tiles),
            in_specs=in_specs,
            out_specs=pl.BlockSpec((None, block_q, C), lambda b, qi: (b, qi, 0)),
            scratch_shapes=[pltpu.VMEM((block_q, C), jnp.float32)],  # proj accumulator
        ),
        compiler_params=pltpu.CompilerParams(
            dimension_semantics=("parallel", "parallel"),
            vmem_limit_bytes=vmem_limit),
    )(x, x, *weights)


def reference(x, gauge_theta, params, *, num_heads):
    """Pure-JAX reference mirroring the PyTorch forward (eval mode)."""
    B, N, C = x.shape
    D = C // num_heads
    xg = x @ params["wg"] + params["bg"]
    xg = xg * gauge_theta[None, None, :]
    x = x + 0.1 * xg
    qkv = x @ params["wqkv"] + params["bqkv"]                 # (B, N, 3C)
    qkv = qkv.reshape(B, N, 3, num_heads, D).transpose(2, 0, 3, 1, 4)
    q, k, v = qkv[0], qkv[1], qkv[2]                          # (B, H, N, D)
    attn = jnp.einsum("bhnd,bhmd->bhnm", q, k) * (D ** -0.5)
    attn = jax.nn.softmax(attn, axis=-1)
    out = jnp.einsum("bhnm,bhmd->bhnd", attn, v)              # (B, H, N, D)
    out = out.transpose(0, 2, 1, 3).reshape(B, N, C)
    return out @ params["wp"] + params["bp"]


if __name__ == "__main__":
    B, N, C = 2, 16, 32
    num_heads = 4

    key = jax.random.PRNGKey(0)
    keys = jax.random.split(key, 8)
    scale = 0.05
    params = {
        # weights stored as (in_features, out_features)
        "wg":   scale * jax.random.normal(keys[0], (C, C), jnp.float32),
        "bg":   scale * jax.random.normal(keys[1], (C,), jnp.float32),
        "wqkv": scale * jax.random.normal(keys[2], (C, 3 * C), jnp.float32),
        "bqkv": scale * jax.random.normal(keys[3], (3 * C,), jnp.float32),
        "wp":   scale * jax.random.normal(keys[4], (C, C), jnp.float32),
        "bp":   scale * jax.random.normal(keys[5], (C,), jnp.float32),
    }
    x = jax.random.normal(keys[6], (B, N, C), jnp.float32)
    gauge_theta = jax.random.normal(keys[7], (C,), jnp.float32)

    # block_q=8 exercises the query-row-tile grid axis (grid = (2, 2)).
    out = gauge_equivariant_attention(x, gauge_theta, params,
                                      num_heads=num_heads, block_q=8)
    out = jax.block_until_ready(out)

    ref = jax.block_until_ready(reference(x, gauge_theta, params, num_heads=num_heads))
    assert out.shape == (B, N, C)
    assert jnp.allclose(out, ref, rtol=1e-2, atol=1e-2), "mismatch vs reference"

    print("KERNEL_OK")
</pallas_src>

<mosaic_0001>
module attributes {stable_mosaic.version = 11 : i64} {
  func.func @gauge_attn_kernel(%arg0: i32, %arg1: i32, %arg2: memref<1x8x32xf32, #tpu.memory_space<vmem>>, %arg3: memref<1x16x32xf32, #tpu.memory_space<vmem>>, %arg4: memref<1x32xf32, #tpu.memory_space<vmem>>, %arg5: memref<32x32xf32, #tpu.memory_space<vmem>>, %arg6: memref<1x32xf32, #tpu.memory_space<vmem>>, %arg7: memref<4x32x8xf32, #tpu.memory_space<vmem>>, %arg8: memref<4x32x8xf32, #tpu.memory_space<vmem>>, %arg9: memref<4x32x8xf32, #tpu.memory_space<vmem>>, %arg10: memref<4x1x8xf32, #tpu.memory_space<vmem>>, %arg11: memref<4x1x8xf32, #tpu.memory_space<vmem>>, %arg12: memref<4x1x8xf32, #tpu.memory_space<vmem>>, %arg13: memref<4x8x32xf32, #tpu.memory_space<vmem>>, %arg14: memref<1x32xf32, #tpu.memory_space<vmem>>, %arg15: memref<1x8x32xf32, #tpu.memory_space<vmem>>, %arg16: memref<8x32xf32, #tpu.memory_space<vmem>>) attributes {dimension_semantics = [#tpu.dimension_semantics<parallel>, #tpu.dimension_semantics<parallel>], iteration_bounds = array<i64: 2, 2>, scalar_prefetch = 0 : i64, scratch_operands = 1 : i64, tpu.core_type = #tpu.core_type<tc>, window_params = [{transform_indices = @transform_0, window_bounds = array<i64: 1, 8, 32>}, {transform_indices = @transform_1, window_bounds = array<i64: 1, 16, 32>}, {pipeline_mode = #tpu.pipeline_mode<synchronous>, transform_indices = @transform_2, window_bounds = array<i64: 1, 32>}, {pipeline_mode = #tpu.pipeline_mode<synchronous>, transform_indices = @transform_3, window_bounds = array<i64: 32, 32>}, {pipeline_mode = #tpu.pipeline_mode<synchronous>, transform_indices = @transform_4, window_bounds = array<i64: 1, 32>}, {pipeline_mode = #tpu.pipeline_mode<synchronous>, transform_indices = @transform_5, window_bounds = array<i64: 4, 32, 8>}, {pipeline_mode = #tpu.pipeline_mode<synchronous>, transform_indices = @transform_6, window_bounds = array<i64: 4, 32, 8>}, {pipeline_mode = #tpu.pipeline_mode<synchronous>, transform_indices = @transform_7, window_bounds = array<i64: 4, 32, 8>}, {pipeline_mode = #tpu.pipeline_mode<synchronous>, transform_indices = @transform_8, window_bounds = array<i64: 4, 1, 8>}, {pipeline_mode = #tpu.pipeline_mode<synchronous>, transform_indices = @transform_9, window_bounds = array<i64: 4, 1, 8>}, {pipeline_mode = #tpu.pipeline_mode<synchronous>, transform_indices = @transform_10, window_bounds = array<i64: 4, 1, 8>}, {pipeline_mode = #tpu.pipeline_mode<synchronous>, transform_indices = @transform_11, window_bounds = array<i64: 4, 8, 32>}, {pipeline_mode = #tpu.pipeline_mode<synchronous>, transform_indices = @transform_12, window_bounds = array<i64: 1, 32>}, {transform_indices = @transform_13, window_bounds = array<i64: 1, 8, 32>}]} {
    %c0 = arith.constant 0 : index
    %c0_0 = arith.constant 0 : index
    %0 = vector.load %arg4[%c0, %c0_0] : memref<1x32xf32, #tpu.memory_space<vmem>>, vector<1x32xf32>
    %c0_1 = arith.constant 0 : index
    %c0_2 = arith.constant 0 : index
    %c0_3 = arith.constant 0 : index
    %1 = vector.load %arg2[%c0_1, %c0_2, %c0_3] : memref<1x8x32xf32, #tpu.memory_space<vmem>>, vector<1x8x32xf32>
    %2 = vector.shape_cast %1 : vector<1x8x32xf32> to vector<8x32xf32>
    %c0_4 = arith.constant 0 : index
    %c0_5 = arith.constant 0 : index
    %3 = vector.load %arg5[%c0_4, %c0_5] : memref<32x32xf32, #tpu.memory_space<vmem>>, vector<32x32xf32>
    %cst = arith.constant dense<0.000000e+00> : vector<8x32xf32>
    %4 = tpu.matmul %2, %3, %cst {dimension_numbers = #tpu.dot_dimension_numbers<[1], [0], [0], [1], [0, 0, 1, 1], [], []>} : vector<8x32xf32>, vector<32x32xf32>, vector<8x32xf32> -> vector<8x32xf32>
    %c0_6 = arith.constant 0 : index
    %c0_7 = arith.constant 0 : index
    %5 = vector.load %arg6[%c0_6, %c0_7] : memref<1x32xf32, #tpu.memory_space<vmem>>, vector<1x32xf32>
    %6 = vector.broadcast %5 : vector<1x32xf32> to vector<8x32xf32>
    %7 = arith.addf %4, %6 : vector<8x32xf32>
    %8 = vector.broadcast %0 : vector<1x32xf32> to vector<8x32xf32>
    %9 = arith.mulf %7, %8 : vector<8x32xf32>
    %10 = arith.addf %2, %9 : vector<8x32xf32>
    %c0_8 = arith.constant 0 : index
    %c0_9 = arith.constant 0 : index
    %c0_10 = arith.constant 0 : index
    %11 = vector.load %arg3[%c0_8, %c0_9, %c0_10] : memref<1x16x32xf32, #tpu.memory_space<vmem>>, vector<1x16x32xf32>
    %12 = vector.shape_cast %11 : vector<1x16x32xf32> to vector<16x32xf32>
    %c0_11 = arith.constant 0 : index
    %c0_12 = arith.constant 0 : index
    %13 = vector.load %arg5[%c0_11, %c0_12] : memref<32x32xf32, #tpu.memory_space<vmem>>, vector<32x32xf32>
    %cst_13 = arith.constant dense<0.000000e+00> : vector<16x32xf32>
    %14 = tpu.matmul %12, %13, %cst_13 {dimension_numbers = #tpu.dot_dimension_numbers<[1], [0], [0], [1], [0, 0, 1, 1], [], []>} : vector<16x32xf32>, vector<32x32xf32>, vector<16x32xf32> -> vector<16x32xf32>
    %c0_14 = arith.constant 0 : index
    %c0_15 = arith.constant 0 : index
    %15 = vector.load %arg6[%c0_14, %c0_15] : memref<1x32xf32, #tpu.memory_space<vmem>>, vector<1x32xf32>
    %16 = vector.broadcast %15 : vector<1x32xf32> to vector<16x32xf32>
    %17 = arith.addf %14, %16 : vector<16x32xf32>
    %18 = vector.broadcast %0 : vector<1x32xf32> to vector<16x32xf32>
    %19 = arith.mulf %17, %18 : vector<16x32xf32>
    %20 = arith.addf %12, %19 : vector<16x32xf32>
    %cst_16 = arith.constant 0.000000e+00 : f32
    %21 = vector.broadcast %cst_16 : f32 to vector<8x32xf32>
    %c0_17 = arith.constant 0 : index
    %c0_18 = arith.constant 0 : index
    %22 = vector.load %arg16[%c0_17, %c0_18] : memref<8x32xf32, #tpu.memory_space<vmem>>, vector<8x32xf32>
    tpu.vector_store %arg16[%c0_17, %c0_18], %21 {strides = array<i32>} : memref<8x32xf32, #tpu.memory_space<vmem>>, vector<8x32xf32>,
    %c0_i32 = arith.constant 0 : i32
    %c4_i32 = arith.constant 4 : i32
    %23 = arith.addi %c0_i32, %c4_i32 : i32
    %c1_i32 = arith.constant 1 : i32
    scf.for %arg17 = %c0_i32 to %23 step %c1_i32  : i32 {
      %31 = arith.index_cast %arg17 : i32 to index
      %c0_27 = arith.constant 0 : index
      %c0_28 = arith.constant 0 : index
      %32 = vector.load %arg7[%31, %c0_27, %c0_28] : memref<4x32x8xf32, #tpu.memory_space<vmem>>, vector<1x32x8xf32>
      %33 = vector.shape_cast %32 : vector<1x32x8xf32> to vector<32x8xf32>
      %cst_29 = arith.constant dense<0.000000e+00> : vector<8x8xf32>
      %34 = tpu.matmul %10, %33, %cst_29 {dimension_numbers = #tpu.dot_dimension_numbers<[1], [0], [0], [1], [0, 0, 1, 1], [], []>} : vector<8x32xf32>, vector<32x8xf32>, vector<8x8xf32> -> vector<8x8xf32>
      %35 = arith.index_cast %arg17 : i32 to index
      %c0_30 = arith.constant 0 : index
      %c0_31 = arith.constant 0 : index
      %36 = vector.load %arg10[%35, %c0_30, %c0_31] : memref<4x1x8xf32, #tpu.memory_space<vmem>>, vector<1x1x8xf32>
      %37 = vector.shape_cast %36 : vector<1x1x8xf32> to vector<1x8xf32>
      %38 = vector.broadcast %37 : vector<1x8xf32> to vector<8x8xf32>
      %39 = arith.addf %34, %38 : vector<8x8xf32>
      %40 = arith.index_cast %arg17 : i32 to index
      %c0_32 = arith.constant 0 : index
      %c0_33 = arith.constant 0 : index
      %41 = vector.load %arg8[%40, %c0_32, %c0_33] : memref<4x32x8xf32, #tpu.memory_space<vmem>>, vector<1x32x8xf32>
      %42 = vector.shape_cast %41 : vector<1x32x8xf32> to vector<32x8xf32>
      %cst_34 = arith.constant dense<0.000000e+00> : vector<16x8xf32>
      %43 = tpu.matmul %20, %42, %cst_34 {dimension_numbers = #tpu.dot_dimension_numbers<[1], [0], [0], [1], [0, 0, 1, 1], [], []>} : vector<16x32xf32>, vector<32x8xf32>, vector<16x8xf32> -> vector<16x8xf32>
      %44 = arith.index_cast %arg17 : i32 to index
      %c0_35 = arith.constant 0 : index
      %c0_36 = arith.constant 0 : index
      %45 = vector.load %arg11[%44, %c0_35, %c0_36] : memref<4x1x8xf32, #tpu.memory_space<vmem>>, vector<1x1x8xf32>
      %46 = vector.shape_cast %45 : vector<1x1x8xf32> to vector<1x8xf32>
      %47 = vector.broadcast %46 : vector<1x8xf32> to vector<16x8xf32>
      %48 = arith.addf %43, %47 : vector<16x8xf32>
      %49 = arith.index_cast %arg17 : i32 to index
      %c0_37 = arith.constant 0 : index
      %c0_38 = arith.constant 0 : index
      %50 = vector.load %arg9[%49, %c0_37, %c0_38] : memref<4x32x8xf32, #tpu.memory_space<vmem>>, vector<1x32x8xf32>
      %51 = vector.shape_cast %50 : vector<1x32x8xf32> to vector<32x8xf32>
      %cst_39 = arith.constant dense<0.000000e+00> : vector<16x8xf32>
      %52 = tpu.matmul %20, %51, %cst_39 {dimension_numbers = #tpu.dot_dimension_numbers<[1], [0], [0], [1], [0, 0, 1, 1], [], []>} : vector<16x32xf32>, vector<32x8xf32>, vector<16x8xf32> -> vector<16x8xf32>
      %53 = arith.index_cast %arg17 : i32 to index
      %c0_40 = arith.constant 0 : index
      %c0_41 = arith.constant 0 : index
      %54 = vector.load %arg12[%53, %c0_40, %c0_41] : memref<4x1x8xf32, #tpu.memory_space<vmem>>, vector<1x1x8xf32>
      %55 = vector.shape_cast %54 : vector<1x1x8xf32> to vector<1x8xf32>
      %56 = vector.broadcast %55 : vector<1x8xf32> to vector<16x8xf32>
      %57 = arith.addf %52, %56 : vector<16x8xf32>
      %cst_42 = arith.constant dense<0.000000e+00> : vector<8x16xf32>
      %58 = tpu.matmul %39, %48, %cst_42 {dimension_numbers = #tpu.dot_dimension_numbers<[1], [1], [0], [0], [0, 0, 1, 0], [], []>} : vector<8x8xf32>, vector<16x8xf32>, vector<8x16xf32> -> vector<8x16xf32>
      %cst_43 = arith.constant 0.353553385 : f32
      %59 = vector.broadcast %cst_43 : f32 to vector<8x16xf32>
      %60 = arith.mulf %58, %59 : vector<8x16xf32>
      %cst_44 = arith.constant dense<0xFF800000> : vector<8xf32>
      %61 = vector.multi_reduction <maximumf>, %60, %cst_44 [1] : vector<8x16xf32> to vector<8xf32>
      %62 = vector.shape_cast %61 : vector<8xf32> to vector<8x1xf32>
      %63 = vector.broadcast %62 : vector<8x1xf32> to vector<8x16xf32>
      %64 = arith.subf %60, %63 : vector<8x16xf32>
      %65 = math.exp %64 : vector<8x16xf32>
      %cst_45 = arith.constant dense<0.000000e+00> : vector<8xf32>
      %66 = vector.multi_reduction <add>, %65, %cst_45 [1] : vector<8x16xf32> to vector<8xf32>
      %67 = vector.shape_cast %66 : vector<8xf32> to vector<8x1xf32>
      %68 = tpu.reciprocal %67 {approx = true} : vector<8x1xf32> -> vector<8x1xf32>
      %69 = vector.broadcast %68 : vector<8x1xf32> to vector<8x16xf32>
      %70 = arith.mulf %65, %69 : vector<8x16xf32>
      %cst_46 = arith.constant dense<0.000000e+00> : vector<8x8xf32>
      %71 = tpu.matmul %70, %57, %cst_46 {dimension_numbers = #tpu.dot_dimension_numbers<[1], [0], [0], [1], [0, 0, 1, 1], [], []>} : vector<8x16xf32>, vector<16x8xf32>, vector<8x8xf32> -> vector<8x8xf32>
      %c0_47 = arith.constant 0 : index
      %c0_48 = arith.constant 0 : index
      %72 = vector.load %arg16[%c0_47, %c0_48] : memref<8x32xf32, #tpu.memory_space<vmem>>, vector<8x32xf32>
      %73 = arith.index_cast %arg17 : i32 to index
      %c0_49 = arith.constant 0 : index
      %c0_50 = arith.constant 0 : index
      %74 = vector.load %arg13[%73, %c0_49, %c0_50] : memref<4x8x32xf32, #tpu.memory_space<vmem>>, vector<1x8x32xf32>
      %75 = vector.shape_cast %74 : vector<1x8x32xf32> to vector<8x32xf32>
      %cst_51 = arith.constant dense<0.000000e+00> : vector<8x32xf32>
      %76 = tpu.matmul %71, %75, %cst_51 {dimension_numbers = #tpu.dot_dimension_numbers<[1], [0], [0], [1], [0, 0, 1, 1], [], []>} : vector<8x8xf32>, vector<8x32xf32>, vector<8x32xf32> -> vector<8x32xf32>
      %77 = arith.addf %72, %76 : vector<8x32xf32>
      %c0_52 = arith.constant 0 : index
      %c0_53 = arith.constant 0 : index
      %78 = vector.load %arg16[%c0_52, %c0_53] : memref<8x32xf32, #tpu.memory_space<vmem>>, vector<8x32xf32>
      tpu.vector_store %arg16[%c0_52, %c0_53], %77 {strides = array<i32>} : memref<8x32xf32, #tpu.memory_space<vmem>>, vector<8x32xf32>,
    }
    %c4_i32_19 = arith.constant 4 : i32
    %c0_20 = arith.constant 0 : index
    %c0_21 = arith.constant 0 : index
    %24 = vector.load %arg16[%c0_20, %c0_21] : memref<8x32xf32, #tpu.memory_space<vmem>>, vector<8x32xf32>
    %c0_22 = arith.constant 0 : index
    %c0_23 = arith.constant 0 : index
    %25 = vector.load %arg14[%c0_22, %c0_23] : memref<1x32xf32, #tpu.memory_space<vmem>>, vector<1x32xf32>
    %26 = vector.broadcast %25 : vector<1x32xf32> to vector<8x32xf32>
    %27 = arith.addf %24, %26 : vector<8x32xf32>
    %c0_24 = arith.constant 0 : index
    %c0_25 = arith.constant 0 : index
    %c0_26 = arith.constant 0 : index
    %28 = vector.load %arg15[%c0_24, %c0_25, %c0_26] : memref<1x8x32xf32, #tpu.memory_space<vmem>>, vector<1x8x32xf32>
    %29 = vector.shape_cast %28 : vector<1x8x32xf32> to vector<8x32xf32>
    %30 = vector.shape_cast %27 : vector<8x32xf32> to vector<1x8x32xf32>
    tpu.vector_store %arg15[%c0_24, %c0_25, %c0_26], %30 {strides = array<i32>} : memref<1x8x32xf32, #tpu.memory_space<vmem>>, vector<1x8x32xf32>,
    return
  }
  func.func @transform_0(%arg0: i32, %arg1: i32) -> (i32, i32, i32) {
    %c0_i32 = arith.constant 0 : i32
    %c0_i32_0 = arith.constant 0 : i32
    return %arg0, %arg1, %c0_i32 : i32, i32, i32
  }
  func.func @transform_1(%arg0: i32, %arg1: i32) -> (i32, i32, i32) {
    %c0_i32 = arith.constant 0 : i32
    %c0_i32_0 = arith.constant 0 : i32
    %c0_i32_1 = arith.constant 0 : i32
    return %arg0, %c0_i32, %c0_i32_0 : i32, i32, i32
  }
  func.func @transform_2(%arg0: i32, %arg1: i32) -> (i32, i32) {
    %c0_i32 = arith.constant 0 : i32
    %c0_i32_0 = arith.constant 0 : i32
    %c0_i32_1 = arith.constant 0 : i32
    return %c0_i32, %c0_i32_0 : i32, i32
  }
  func.func @transform_3(%arg0: i32, %arg1: i32) -> (i32, i32) {
    %c0_i32 = arith.constant 0 : i32
    %c0_i32_0 = arith.constant 0 : i32
    %c0_i32_1 = arith.constant 0 : i32
    return %c0_i32, %c0_i32_0 : i32, i32
  }
  func.func @transform_4(%arg0: i32, %arg1: i32) -> (i32, i32) {
    %c0_i32 = arith.constant 0 : i32
    %c0_i32_0 = arith.constant 0 : i32
    %c0_i32_1 = arith.constant 0 : i32
    return %c0_i32, %c0_i32_0 : i32, i32
  }
  func.func @transform_5(%arg0: i32, %arg1: i32) -> (i32, i32, i32) {
    %c0_i32 = arith.constant 0 : i32
    %c0_i32_0 = arith.constant 0 : i32
    %c0_i32_1 = arith.constant 0 : i32
    %c0_i32_2 = arith.constant 0 : i32
    return %c0_i32, %c0_i32_0, %c0_i32_1 : i32, i32, i32
  }
  func.func @transform_6(%arg0: i32, %arg1: i32) -> (i32, i32, i32) {
    %c0_i32 = arith.constant 0 : i32
    %c0_i32_0 = arith.constant 0 : i32
    %c0_i32_1 = arith.constant 0 : i32
    %c0_i32_2 = arith.constant 0 : i32
    return %c0_i32, %c0_i32_0, %c0_i32_1 : i32, i32, i32
  }
  func.func @transform_7(%arg0: i32, %arg1: i32) -> (i32, i32, i32) {
    %c0_i32 = arith.constant 0 : i32
    %c0_i32_0 = arith.constant 0 : i32
    %c0_i32_1 = arith.constant 0 : i32
    %c0_i32_2 = arith.constant 0 : i32
    return %c0_i32, %c0_i32_0, %c0_i32_1 : i32, i32, i32
  }
  func.func @transform_8(%arg0: i32, %arg1: i32) -> (i32, i32, i32) {
    %c0_i32 = arith.constant 0 : i32
    %c0_i32_0 = arith.constant 0 : i32
    %c0_i32_1 = arith.constant 0 : i32
    %c0_i32_2 = arith.constant 0 : i32
    return %c0_i32, %c0_i32_0, %c0_i32_1 : i32, i32, i32
  }
  func.func @transform_9(%arg0: i32, %arg1: i32) -> (i32, i32, i32) {
    %c0_i32 = arith.constant 0 : i32
    %c0_i32_0 = arith.constant 0 : i32
    %c0_i32_1 = arith.constant 0 : i32
    %c0_i32_2 = arith.constant 0 : i32
    return %c0_i32, %c0_i32_0, %c0_i32_1 : i32, i32, i32
  }
  func.func @transform_10(%arg0: i32, %arg1: i32) -> (i32, i32, i32) {
    %c0_i32 = arith.constant 0 : i32
    %c0_i32_0 = arith.constant 0 : i32
    %c0_i32_1 = arith.constant 0 : i32
    %c0_i32_2 = arith.constant 0 : i32
    return %c0_i32, %c0_i32_0, %c0_i32_1 : i32, i32, i32
  }
  func.func @transform_11(%arg0: i32, %arg1: i32) -> (i32, i32, i32) {
    %c0_i32 = arith.constant 0 : i32
    %c0_i32_0 = arith.constant 0 : i32
    %c0_i32_1 = arith.constant 0 : i32
    %c0_i32_2 = arith.constant 0 : i32
    return %c0_i32, %c0_i32_0, %c0_i32_1 : i32, i32, i32
  }
  func.func @transform_12(%arg0: i32, %arg1: i32) -> (i32, i32) {
    %c0_i32 = arith.constant 0 : i32
    %c0_i32_0 = arith.constant 0 : i32
    %c0_i32_1 = arith.constant 0 : i32
    return %c0_i32, %c0_i32_0 : i32, i32
  }
  func.func @transform_13(%arg0: i32, %arg1: i32) -> (i32, i32, i32) {
    %c0_i32 = arith.constant 0 : i32
    %c0_i32_0 = arith.constant 0 : i32
    return %arg0, %arg1, %c0_i32 : i32, i32, i32
  }
}

</mosaic_0001>

<llo_original>
// kernel: tpu_custom_call.1
$region0: #{tpu_custom_call.1}
  #allocation0 [shape = 'u32[]', space=smem, size = 0x4, offset = 0x4, fixed_abs, tag = 'smem constant byte address 0x4 - core index']
  #allocation1 [shape = 'u32[72,128]{1,0:T(1,128)}', space=vmem, size = 0x9000, scoped, tag = 'internal scratch']
  #allocation2 [shape = 'f32[8,32]{1,0:T(8,128)}', space=vmem, size = 0x1000, scoped, tag = 'scratch operand']
  %s0 = inlined_call_operand.vmem [shape: f32[2,16,32], index: 0, kind: input, shape index: {}]
  %s1 = inlined_call_operand.vmem [shape: f32[2,16,32], index: 1, kind: input, shape index: {}]
  %s2 = inlined_call_operand.vmem [shape: f32[1,32], index: 2, kind: input, shape index: {}]
  %s3 = inlined_call_operand.vmem [shape: f32[32,32], index: 3, kind: input, shape index: {}]
  %s4 = inlined_call_operand.vmem [shape: f32[1,32], index: 4, kind: input, shape index: {}]
  %s5 = inlined_call_operand.vmem [shape: f32[4,32,8], index: 5, kind: input, shape index: {}]
  %s6 = inlined_call_operand.vmem [shape: f32[4,32,8], index: 6, kind: input, shape index: {}]
  %s7 = inlined_call_operand.vmem [shape: f32[4,32,8], index: 7, kind: input, shape index: {}]
  %s8 = inlined_call_operand.vmem [shape: f32[4,1,8], index: 8, kind: input, shape index: {}]
  %s9 = inlined_call_operand.vmem [shape: f32[4,1,8], index: 9, kind: input, shape index: {}]
  %s10 = inlined_call_operand.vmem [shape: f32[4,1,8], index: 10, kind: input, shape index: {}]
  %s11 = inlined_call_operand.vmem [shape: f32[4,8,32], index: 11, kind: input, shape index: {}]
  %s12 = inlined_call_operand.vmem [shape: f32[1,32], index: 12, kind: input, shape index: {}]
  %s13 = inlined_call_operand.hbm [shape: f32[2,16,32], index: 13, kind: output, shape index: {}]
  %s14 = sld [smem:[#allocation0]]
  $region92: #{tpu_custom_call.1} parent=0
    _
  %s16 = ssub.s32 1, %s14
  %s17 = scalar_select 0, %s16, %s14
  $region1: #{tpu_custom_call.1} parent=0
    #allocation3 [shape = 'u8[8192]{0}', space=vmem, size = 0x2000, scoped, tag = 'output window, operand 0']
    #allocation4 [shape = 's32[2]{0}', space=sflag, size = 0x8, scoped, tag = 'scoped memory for tpu_custom_call.1']
    %18 = vsyncpa [#allocation4], 0
    %s19 = scalar_lea.sflag [#allocation4], 1
    %20 = vsyncpa %s19, 0
    loop: start=0, step=1, limit=6
    $region2: #{tpu_custom_call.1} parent=1 // loop_pre_header
      _
    $region3: #{tpu_custom_call.1} parent=1 // loop_header
      %s22 = sphi 0, %s26
      %p23 = scmp.ge.s32.totalorder %s22, 6
      %s29 = sphi 0, %s41
      %s30 = sphi 0, %s37
      %s31 = sphi 0, %s29
      %s32 = sphi 0, %s30
      %s33 = sphi 0, %s31
      %s34 = sphi 0, %s32
      %s46 = sphi 0, %s48
      %s49 = sphi 0, %s46
      %s50 = sphi 0, %s49
      %s66 = sphi 0, %s50
      %s72 = sphi 0, %s74
      %s75 = sphi 0, %s72
      %s76 = sphi 0, %s75
      %s92 = sphi 0, %s76
      %s96 = sphi 0, %s96
      %s98 = sphi 0, %s96
      %s99 = sphi 0, %s98
      %s113 = sphi 0, %s99
      %s117 = sphi 0, %s117
      %s119 = sphi 0, %s117
      %s120 = sphi 0, %s119
      %s134 = sphi 0, %s120
      %s138 = sphi 0, %s138
      %s140 = sphi 0, %s138
      %s141 = sphi 0, %s140
      %s155 = sphi 0, %s141
      %s159 = sphi 0, %s159
      %s161 = sphi 0, %s159
      %s162 = sphi 0, %s161
      %s176 = sphi 0, %s162
      %s180 = sphi 0, %s180
      %s182 = sphi 0, %s180
      %s183 = sphi 0, %s182
      %s197 = sphi 0, %s183
      %s201 = sphi 0, %s201
      %s203 = sphi 0, %s201
      %s204 = sphi 0, %s203
      %s218 = sphi 0, %s204
      %s222 = sphi 0, %s222
      %s224 = sphi 0, %s222
      %s225 = sphi 0, %s224
      %s239 = sphi 0, %s225
      %s243 = sphi 0, %s243
      %s245 = sphi 0, %s243
      %s246 = sphi 0, %s245
      %s260 = sphi 0, %s246
      %s264 = sphi 0, %s264
      %s266 = sphi 0, %s264
      %s267 = sphi 0, %s266
      %s281 = sphi 0, %s267
      %s285 = sphi 0, %s285
      %s287 = sphi 0, %s285
      %s288 = sphi 0, %s287
      %s302 = sphi 0, %s288
      %s306 = sphi 0, %s306
      %s308 = sphi 0, %s306
      %s309 = sphi 0, %s308
      %s323 = sphi 0, %s309
      %s331 = sphi 0, %s333
      %s334 = sphi 0, %s331
      %s335 = sphi 0, %s334
      %s351 = sphi 0, %s335
    $region4: #{tpu_custom_call.1} parent=1 // loop_header_branch
      %25 = sbr.rel (%p23) target = $region8
    $region5: #{tpu_custom_call.1} parent=1 // loop_body
      %s27 = ssub.s32 %s22, 1
      %s28 = ssub.s32 %s22, 2
      %s35 = sadd.s32 1, %s30
      %p36 = scmp.ge.s32.totalorder %s35, 2
      %s37 = scalar_select %p36, 0, %s35
      %s38 = sadd.s32 1, %s29
      %s39 = scalar_select %p36, %s38, %s29
      %p40 = scmp.ge.s32.totalorder %s39, 2
      %s41 = scalar_select %p40, 0, %s39
      %s42 = ssub.s32 %s29, %s41
      %s43 = ssub.s32 %s30, %s37
      %s44 = sor.u32 %s42, %s43
      %p45 = scmp.eq.s32.totalorder %s44, 0
      %s47 = sadd.s32 %s46, 1
      %s48 = scalar_select %p45, %s46, %s47
      %p51 = pneg %p45
      %p52 = scmp.eq.s32.totalorder %s22, 3
      %p53 = por %p51, %p52
      %p54 = scmp.ne.s32.totalorder %s46, %s49
      %p55 = scmp.eq.s32.totalorder %s22, 0
      %p56 = por %p54, %p55
      %p57 = scmp.ne.s32.totalorder %s46, %s49
      %p58 = scmp.eq.s32.totalorder %s27, 3
      %p59 = por %p57, %p58
      %p60 = scmp.ne.s32.totalorder %s49, %s50
      %p61 = scmp.eq.s32.totalorder %s27, 0
      %p62 = por %p60, %p61
      %p63 = scmp.ne.s32.totalorder %s49, %s50
      %p64 = scmp.eq.s32.totalorder %s28, 3
      %p65 = por %p63, %p64
      %p67 = scmp.ne.s32.totalorder %s50, %s66
      %p68 = scmp.eq.s32.totalorder %s28, 0
      %p69 = por %p67, %p68
      %s70 = ssub.s32 %s29, %s41
      %p71 = scmp.eq.s32.totalorder %s70, 0
      %s73 = sadd.s32 %s72, 1
      %s74 = scalar_select %p71, %s72, %s73
      %p77 = pneg %p71
      %p78 = scmp.eq.s32.totalorder %s22, 3
      %p79 = por %p77, %p78
      %p80 = scmp.ne.s32.totalorder %s72, %s75
      %p81 = scmp.eq.s32.totalorder %s22, 0
      %p82 = por %p80, %p81
      %p83 = scmp.ne.s32.totalorder %s72, %s75
      %p84 = scmp.eq.s32.totalorder %s27, 3
      %p85 = por %p83, %p84
      %p86 = scmp.ne.s32.totalorder %s75, %s76
      %p87 = scmp.eq.s32.totalorder %s27, 0
      %p88 = por %p86, %p87
      %p89 = scmp.ne.s32.totalorder %s75, %s76
      %p90 = scmp.eq.s32.totalorder %s28, 3
      %p91 = por %p89, %p90
      %p93 = scmp.ne.s32.totalorder %s76, %s92
      %p94 = scmp.eq.s32.totalorder %s28, 0
      %p95 = por %p93, %p94
      %s97 = sadd.s32 %s96, 1
      %p100 = scmp.eq.s32.totalorder %s22, 3
      %p101 = scmp.ne.s32.totalorder %s96, %s98
      %p102 = scmp.eq.s32.totalorder %s22, 0
      %p103 = por %p101, %p102
      %p104 = scmp.ne.s32.totalorder %s96, %s98
      %p105 = scmp.eq.s32.totalorder %s27, 3
      %p106 = por %p104, %p105
      %p107 = scmp.ne.s32.totalorder %s98, %s99
      %p108 = scmp.eq.s32.totalorder %s27, 0
      %p109 = por %p107, %p108
      %p110 = scmp.ne.s32.totalorder %s98, %s99
      %p111 = scmp.eq.s32.totalorder %s28, 3
      %p112 = por %p110, %p111
      %p114 = scmp.ne.s32.totalorder %s99, %s113
      %p115 = scmp.eq.s32.totalorder %s28, 0
      %p116 = por %p114, %p115
      %s118 = sadd.s32 %s117, 1
      %p121 = scmp.eq.s32.totalorder %s22, 3
      %p122 = scmp.ne.s32.totalorder %s117, %s119
      %p123 = scmp.eq.s32.totalorder %s22, 0
      %p124 = por %p122, %p123
      %p125 = scmp.ne.s32.totalorder %s117, %s119
      %p126 = scmp.eq.s32.totalorder %s27, 3
      %p127 = por %p125, %p126
      %p128 = scmp.ne.s32.totalorder %s119, %s120
      %p129 = scmp.eq.s32.totalorder %s27, 0
      %p130 = por %p128, %p129
      %p131 = scmp.ne.s32.totalorder %s119, %s120
      %p132 = scmp.eq.s32.totalorder %s28, 3
      %p133 = por %p131, %p132
      %p135 = scmp.ne.s32.totalorder %s120, %s134
      %p136 = scmp.eq.s32.totalorder %s28, 0
      %p137 = por %p135, %p136
      %s139 = sadd.s32 %s138, 1
      %p142 = scmp.eq.s32.totalorder %s22, 3
      %p143 = scmp.ne.s32.totalorder %s138, %s140
      %p144 = scmp.eq.s32.totalorder %s22, 0
      %p145 = por %p143, %p144
      %p146 = scmp.ne.s32.totalorder %s138, %s140
      %p147 = scmp.eq.s32.totalorder %s27, 3
      %p148 = por %p146, %p147
      %p149 = scmp.ne.s32.totalorder %s140, %s141
      %p150 = scmp.eq.s32.totalorder %s27, 0
      %p151 = por %p149, %p150
      %p152 = scmp.ne.s32.totalorder %s140, %s141
      %p153 = scmp.eq.s32.totalorder %s28, 3
      %p154 = por %p152, %p153
      %p156 = scmp.ne.s32.totalorder %s141, %s155
      %p157 = scmp.eq.s32.totalorder %s28, 0
      %p158 = por %p156, %p157
      %s160 = sadd.s32 %s159, 1
      %p163 = scmp.eq.s32.totalorder %s22, 3
      %p164 = scmp.ne.s32.totalorder %s159, %s161
      %p165 = scmp.eq.s32.totalorder %s22, 0
      %p166 = por %p164, %p165
      %p167 = scmp.ne.s32.totalorder %s159, %s161
      %p168 = scmp.eq.s32.totalorder %s27, 3
      %p169 = por %p167, %p168
      %p170 = scmp.ne.s32.totalorder %s161, %s162
      %p171 = scmp.eq.s32.totalorder %s27, 0
      %p172 = por %p170, %p171
      %p173 = scmp.ne.s32.totalorder %s161, %s162
      %p174 = scmp.eq.s32.totalorder %s28, 3
      %p175 = por %p173, %p174
      %p177 = scmp.ne.s32.totalorder %s162, %s176
      %p178 = scmp.eq.s32.totalorder %s28, 0
      %p179 = por %p177, %p178
      %s181 = sadd.s32 %s180, 1
      %p184 = scmp.eq.s32.totalorder %s22, 3
      %p185 = scmp.ne.s32.totalorder %s180, %s182
      %p186 = scmp.eq.s32.totalorder %s22, 0
      %p187 = por %p185, %p186
      %p188 = scmp.ne.s32.totalorder %s180, %s182
      %p189 = scmp.eq.s32.totalorder %s27, 3
      %p190 = por %p188, %p189
      %p191 = scmp.ne.s32.totalorder %s182, %s183
      %p192 = scmp.eq.s32.totalorder %s27, 0
      %p193 = por %p191, %p192
      %p194 = scmp.ne.s32.totalorder %s182, %s183
      %p195 = scmp.eq.s32.totalorder %s28, 3
      %p196 = por %p194, %p195
      %p198 = scmp.ne.s32.totalorder %s183, %s197
      %p199 = scmp.eq.s32.totalorder %s28, 0
      %p200 = por %p198, %p199
      %s202 = sadd.s32 %s201, 1
      %p205 = scmp.eq.s32.totalorder %s22, 3
      %p206 = scmp.ne.s32.totalorder %s201, %s203
      %p207 = scmp.eq.s32.totalorder %s22, 0
      %p208 = por %p206, %p207
      %p209 = scmp.ne.s32.totalorder %s201, %s203
      %p210 = scmp.eq.s32.totalorder %s27, 3
      %p211 = por %p209, %p210
      %p212 = scmp.ne.s32.totalorder %s203, %s204
      %p213 = scmp.eq.s32.totalorder %s27, 0
      %p214 = por %p212, %p213
      %p215 = scmp.ne.s32.totalorder %s203, %s204
      %p216 = scmp.eq.s32.totalorder %s28, 3
      %p217 = por %p215, %p216
      %p219 = scmp.ne.s32.totalorder %s204, %s218
      %p220 = scmp.eq.s32.totalorder %s28, 0
      %p221 = por %p219, %p220
      %s223 = sadd.s32 %s222, 1
      %p226 = scmp.eq.s32.totalorder %s22, 3
      %p227 = scmp.ne.s32.totalorder %s222, %s224
      %p228 = scmp.eq.s32.totalorder %s22, 0
      %p229 = por %p227, %p228
      %p230 = scmp.ne.s32.totalorder %s222, %s224
      %p231 = scmp.eq.s32.totalorder %s27, 3
      %p232 = por %p230, %p231
      %p233 = scmp.ne.s32.totalorder %s224, %s225
      %p234 = scmp.eq.s32.totalorder %s27, 0
      %p235 = por %p233, %p234
      %p236 = scmp.ne.s32.totalorder %s224, %s225
      %p237 = scmp.eq.s32.totalorder %s28, 3
      %p238 = por %p236, %p237
      %p240 = scmp.ne.s32.totalorder %s225, %s239
      %p241 = scmp.eq.s32.totalorder %s28, 0
      %p242 = por %p240, %p241
      %s244 = sadd.s32 %s243, 1
      %p247 = scmp.eq.s32.totalorder %s22, 3
      %p248 = scmp.ne.s32.totalorder %s243, %s245
      %p249 = scmp.eq.s32.totalorder %s22, 0
      %p250 = por %p248, %p249
      %p251 = scmp.ne.s32.totalorder %s243, %s245
      %p252 = scmp.eq.s32.totalorder %s27, 3
      %p253 = por %p251, %p252
      %p254 = scmp.ne.s32.totalorder %s245, %s246
      %p255 = scmp.eq.s32.totalorder %s27, 0
      %p256 = por %p254, %p255
      %p257 = scmp.ne.s32.totalorder %s245, %s246
      %p258 = scmp.eq.s32.totalorder %s28, 3
      %p259 = por %p257, %p258
      %p261 = scmp.ne.s32.totalorder %s246, %s260
      %p262 = scmp.eq.s32.totalorder %s28, 0
      %p263 = por %p261, %p262
      %s265 = sadd.s32 %s264, 1
      %p268 = scmp.eq.s32.totalorder %s22, 3
      %p269 = scmp.ne.s32.totalorder %s264, %s266
      %p270 = scmp.eq.s32.totalorder %s22, 0
      %p271 = por %p269, %p270
      %p272 = scmp.ne.s32.totalorder %s264, %s266
      %p273 = scmp.eq.s32.totalorder %s27, 3
      %p274 = por %p272, %p273
      %p275 = scmp.ne.s32.totalorder %s266, %s267
      %p276 = scmp.eq.s32.totalorder %s27, 0
      %p277 = por %p275, %p276
      %p278 = scmp.ne.s32.totalorder %s266, %s267
      %p279 = scmp.eq.s32.totalorder %s28, 3
      %p280 = por %p278, %p279
      %p282 = scmp.ne.s32.totalorder %s267, %s281
      %p283 = scmp.eq.s32.totalorder %s28, 0
      %p284 = por %p282, %p283
      %s286 = sadd.s32 %s285, 1
      %p289 = scmp.eq.s32.totalorder %s22, 3
      %p290 = scmp.ne.s32.totalorder %s285, %s287
      %p291 = scmp.eq.s32.totalorder %s22, 0
      %p292 = por %p290, %p291
      %p293 = scmp.ne.s32.totalorder %s285, %s287
      %p294 = scmp.eq.s32.totalorder %s27, 3
      %p295 = por %p293, %p294
      %p296 = scmp.ne.s32.totalorder %s287, %s288
      %p297 = scmp.eq.s32.totalorder %s27, 0
      %p298 = por %p296, %p297
      %p299 = scmp.ne.s32.totalorder %s287, %s288
      %p300 = scmp.eq.s32.totalorder %s28, 3
      %p301 = por %p299, %p300
      %p303 = scmp.ne.s32.totalorder %s288, %s302
      %p304 = scmp.eq.s32.totalorder %s28, 0
      %p305 = por %p303, %p304
      %s307 = sadd.s32 %s306, 1
      %p310 = scmp.eq.s32.totalorder %s22, 3
      %p311 = scmp.ne.s32.totalorder %s306, %s308
      %p312 = scmp.eq.s32.totalorder %s22, 0
      %p313 = por %p311, %p312
      %p314 = scmp.ne.s32.totalorder %s306, %s308
      %p315 = scmp.eq.s32.totalorder %s27, 3
      %p316 = por %p314, %p315
      %p317 = scmp.ne.s32.totalorder %s308, %s309
      %p318 = scmp.eq.s32.totalorder %s27, 0
      %p319 = por %p317, %p318
      %p320 = scmp.ne.s32.totalorder %s308, %s309
      %p321 = scmp.eq.s32.totalorder %s28, 3
      %p322 = por %p320, %p321
      %p324 = scmp.ne.s32.totalorder %s309, %s323
      %p325 = scmp.eq.s32.totalorder %s28, 0
      %p326 = por %p324, %p325
      %s327 = ssub.s32 %s29, %s41
      %s328 = ssub.s32 %s30, %s37
      %s329 = sor.u32 %s327, %s328
      %p330 = scmp.eq.s32.totalorder %s329, 0
      %s332 = sadd.s32 %s331, 1
      %s333 = scalar_select %p330, %s331, %s332
      %p336 = pneg %p330
      %p337 = scmp.eq.s32.totalorder %s22, 3
      %p338 = por %p336, %p337
      %p339 = scmp.ne.s32.totalorder %s331, %s334
      %p340 = scmp.eq.s32.totalorder %s22, 0
      %p341 = por %p339, %p340
      %p342 = scmp.ne.s32.totalorder %s331, %s334
      %p343 = scmp.eq.s32.totalorder %s27, 3
      %p344 = por %p342, %p343
      %p345 = scmp.ne.s32.totalorder %s334, %s335
      %p346 = scmp.eq.s32.totalorder %s27, 0
      %p347 = por %p345, %p346
      %p348 = scmp.ne.s32.totalorder %s334, %s335
      %p349 = scmp.eq.s32.totalorder %s28, 3
      %p350 = por %p348, %p349
      %p352 = scmp.ne.s32.totalorder %s335, %s351
      %p353 = scmp.eq.s32.totalorder %s28, 0
      %p354 = por %p352, %p353
      %p355 = scmp.le.s32.totalorder 1, %s22
      %p356 = scmp.lt.s32.totalorder %s22, 5
      %p357 = pnand %p355, %p356
      %p358 = pneg %p357
      // Predicated region
      $region9: #{tpu_custom_call.1} parent=5 // pred_check
        _
      $region10: #{tpu_custom_call.1} parent=5 // pred_check_branch
        %360 = sbr.rel (%p357) target = $region12
      $region11: #{tpu_custom_call.1} parent=5 // pred_region
        %s361 = ssub.s32 %s22, 1
        // Predicated region
        $region13: #{tpu_custom_call.1} parent=11 // pred_check
          %p362 = pneg %p109
        $region14: #{tpu_custom_call.1} parent=11 // pred_check_branch
          %364 = sbr.rel (%p362) target = $region16
        $region15: #{tpu_custom_call.1} parent=11 // pred_region
          _
        $region16: #{tpu_custom_call.1} parent=11 // pred_fallthru
          _
        // Predicated region
        $region17: #{tpu_custom_call.1} parent=11 // pred_check
          %p365 = pneg %p130
        $region18: #{tpu_custom_call.1} parent=11 // pred_check_branch
          %367 = sbr.rel (%p365) target = $region20
        $region19: #{tpu_custom_call.1} parent=11 // pred_region
          _
        $region20: #{tpu_custom_call.1} parent=11 // pred_fallthru
          _
        // Predicated region
        $region21: #{tpu_custom_call.1} parent=11 // pred_check
          %p368 = pneg %p151
        $region22: #{tpu_custom_call.1} parent=11 // pred_check_branch
          %370 = sbr.rel (%p368) target = $region24
        $region23: #{tpu_custom_call.1} parent=11 // pred_region
          _
        $region24: #{tpu_custom_call.1} parent=11 // pred_fallthru
          _
        // Predicated region
        $region25: #{tpu_custom_call.1} parent=11 // pred_check
          %p371 = pneg %p172
        $region26: #{tpu_custom_call.1} parent=11 // pred_check_branch
          %373 = sbr.rel (%p371) target = $region28
        $region27: #{tpu_custom_call.1} parent=11 // pred_region
          _
        $region28: #{tpu_custom_call.1} parent=11 // pred_fallthru
          _
        // Predicated region
        $region29: #{tpu_custom_call.1} parent=11 // pred_check
          %p374 = pneg %p193
        $region30: #{tpu_custom_call.1} parent=11 // pred_check_branch
          %376 = sbr.rel (%p374) target = $region32
        $region31: #{tpu_custom_call.1} parent=11 // pred_region
          _
        $region32: #{tpu_custom_call.1} parent=11 // pred_fallthru
          _
        // Predicated region
        $region33: #{tpu_custom_call.1} parent=11 // pred_check
          %p377 = pneg %p214
        $region34: #{tpu_custom_call.1} parent=11 // pred_check_branch
          %379 = sbr.rel (%p377) target = $region36
        $region35: #{tpu_custom_call.1} parent=11 // pred_region
          _
        $region36: #{tpu_custom_call.1} parent=11 // pred_fallthru
          _
        // Predicated region
        $region37: #{tpu_custom_call.1} parent=11 // pred_check
          %p380 = pneg %p235
        $region38: #{tpu_custom_call.1} parent=11 // pred_check_branch
          %382 = sbr.rel (%p380) target = $region40
        $region39: #{tpu_custom_call.1} parent=11 // pred_region
          _
        $region40: #{tpu_custom_call.1} parent=11 // pred_fallthru
          _
        // Predicated region
        $region41: #{tpu_custom_call.1} parent=11 // pred_check
          %p383 = pneg %p256
        $region42: #{tpu_custom_call.1} parent=11 // pred_check_branch
          %385 = sbr.rel (%p383) target = $region44
        $region43: #{tpu_custom_call.1} parent=11 // pred_region
          _
        $region44: #{tpu_custom_call.1} parent=11 // pred_fallthru
          _
        // Predicated region
        $region45: #{tpu_custom_call.1} parent=11 // pred_check
          %p386 = pneg %p277
        $region46: #{tpu_custom_call.1} parent=11 // pred_check_branch
          %388 = sbr.rel (%p386) target = $region48
        $region47: #{tpu_custom_call.1} parent=11 // pred_region
          _
        $region48: #{tpu_custom_call.1} parent=11 // pred_fallthru
          _
        // Predicated region
        $region49: #{tpu_custom_call.1} parent=11 // pred_check
          %p389 = pneg %p298
        $region50: #{tpu_custom_call.1} parent=11 // pred_check_branch
          %391 = sbr.rel (%p389) target = $region52
        $region51: #{tpu_custom_call.1} parent=11 // pred_region
          _
        $region52: #{tpu_custom_call.1} parent=11 // pred_fallthru
          _
        // Predicated region
        $region53: #{tpu_custom_call.1} parent=11 // pred_check
          %p392 = pneg %p319
        $region54: #{tpu_custom_call.1} parent=11 // pred_check_branch
          %394 = sbr.rel (%p392) target = $region56
        $region55: #{tpu_custom_call.1} parent=11 // pred_region
          _
        $region56: #{tpu_custom_call.1} parent=11 // pred_fallthru
          _
      $region12: #{tpu_custom_call.1} parent=5 // pred_fallthru
        _
      %p395 = scmp.lt.s32.totalorder %s22, 4
      // Predicated region
      $region57: #{tpu_custom_call.1} parent=5 // pred_check
        %p396 = pneg %p395
      $region58: #{tpu_custom_call.1} parent=5 // pred_check_branch
        %398 = sbr.rel (%p396) target = $region60
      $region59: #{tpu_custom_call.1} parent=5 // pred_region
        // Predicated region
        $region61: #{tpu_custom_call.1} parent=59 // pred_check
          %p399 = pneg %p56
        $region62: #{tpu_custom_call.1} parent=59 // pred_check_branch
          %401 = sbr.rel (%p399) target = $region64
        $region63: #{tpu_custom_call.1} parent=59 // pred_region
          %p402 = scmp.lt.s32.totalorder %s29, 1
          %s403 = scalar_select %p402, %s29, 1
          %p404 = scmp.lt.s32.totalorder %s30, 1
          %s405 = scalar_select %p404, %s30, 1
          %s406 = smul.addr %s403, 2
          %s407 = sadd.s32 %s405, %s406
          %s408 = smul.addr %s407, 8
          %s409 = scalar_lea.vmem %s0, %s408
        $region64: #{tpu_custom_call.1} parent=59 // pred_fallthru
          _
        // Predicated region
        $region65: #{tpu_custom_call.1} parent=59 // pred_check
          %p410 = pneg %p82
        $region66: #{tpu_custom_call.1} parent=59 // pred_check_branch
          %412 = sbr.rel (%p410) target = $region68
        $region67: #{tpu_custom_call.1} parent=59 // pred_region
          %p413 = scmp.lt.s32.totalorder %s29, 1
          %s414 = scalar_select %p413, %s29, 1
          %s415 = smul.addr %s414, 2
          %s416 = smul.addr %s415, 8
          %s417 = scalar_lea.vmem %s1, %s416
        $region68: #{tpu_custom_call.1} parent=59 // pred_fallthru
          _
      $region60: #{tpu_custom_call.1} parent=5 // pred_fallthru
        _
      %p418 = scmp.le.s32.totalorder 1, %s22
      %p419 = scmp.lt.s32.totalorder %s22, 5
      %p420 = pnand %p418, %p419
      %p421 = pneg %p420
      // Predicated region
      $region69: #{tpu_custom_call.1} parent=5 // pred_check
        _
      $region70: #{tpu_custom_call.1} parent=5 // pred_check_branch
        %423 = sbr.rel (%p420) target = $region72
      $region71: #{tpu_custom_call.1} parent=5 // pred_region
        %s424 = ssub.s32 %s22, 1
        %p425 = scmp.lt.s32.totalorder %s31, 1
        %s426 = scalar_select %p425, %s31, 1
        %p427 = scmp.lt.s32.totalorder %s32, 1
        %s428 = scalar_select %p427, %s32, 1
        %s429 = smul.addr %s426, 2
        %s430 = sadd.s32 %s428, %s429
        %s431 = smul.addr %s430, 8
        %s432 = scalar_lea.vmem %s0, %s431
        %p433 = pneg %p62
        %p434 = pneg %p59
        %p435 = scmp.lt.s32.totalorder %s31, 1
        %s436 = scalar_select %p435, %s31, 1
        %s437 = smul.addr %s436, 2
        %s438 = smul.addr %s437, 8
        %s439 = scalar_lea.vmem %s1, %s438
        %p440 = pneg %p88
        %p441 = pneg %p85
        %p442 = pneg %p109
        %p443 = pneg %p106
        %p444 = pneg %p130
        %p445 = pneg %p127
        %p446 = pneg %p151
        %p447 = pneg %p148
        %p448 = pneg %p172
        %p449 = pneg %p169
        %p450 = pneg %p193
        %p451 = pneg %p190
        %p452 = pneg %p214
        %p453 = pneg %p211
        %p454 = pneg %p235
        %p455 = pneg %p232
        %p456 = pneg %p256
        %p457 = pneg %p253
        %p458 = pneg %p277
        %p459 = pneg %p274
        %p460 = pneg %p298
        %p461 = pneg %p295
        %p462 = pneg %p319
        %p463 = pneg %p316
        %p464 = pneg %p347
        %p465 = pneg %p344
        %s466 = sand.u32 %s334, 1
        %s467 = scalar_lea.sflag [#allocation4], %s466
        %s468 = sand.u32 %s334, 1
        %s469 = smul.addr %s468, 8
        %s470 = scalar_lea.vmem [#allocation3], %s469
        %p471 = scmp.lt.s32.totalorder %s31, 1
        %s472 = scalar_select %p471, %s31, 1
        %p473 = scmp.lt.s32.totalorder %s32, 1
        %s474 = scalar_select %p473, %s32, 1
        %s475 = smul.addr %s472, 2
        %s476 = sadd.s32 %s474, %s475
        %s477 = smul.addr %s476, 8
        %s478 = scalar_lea.vmem %s0, %s477
        %p479 = scmp.lt.s32.totalorder %s31, 1
        %s480 = scalar_select %p479, %s31, 1
        %s481 = smul.addr %s480, 2
        %s482 = smul.addr %s481, 8
        %s483 = scalar_lea.vmem %s1, %s482
        %v484 = vld [vmem:[%s2] sm:$0x1]
        %v485 = vld [vmem:[%s478] sm:$0xff]
        %v486 = vld [vmem:[%s3] sm:$0xff]
        %v487 = vld [vmem:[%s3 + $0x8] sm:$0xff]
        %v488 = vld [vmem:[%s3 + $0x10] sm:$0xff]
        %v489 = vld [vmem:[%s3 + $0x18] sm:$0xff]
        %v490 = vld [vmem:[%s4] sm:$0x1]
        %v492 = vperm.slane %v490, 0
        %vm494 = vcmask 261120
        %v496 = vsel %vm494, %v485, 0
        %498 = vmatpush.msra.mxu0 0.0
        %499 = vmatpush.msra.mxu0 0.0
        %500 = vmatpush.msra.mxu0 0.0
        %501 = vmatpush.msra.mxu0 0.0
        %502 = vmatpush.msra.mxu0 0.0
        %503 = vmatpush.msra.mxu0 0.0
        %504 = vmatpush.msra.mxu0 0.0
        %505 = vmatpush.msra.mxu0 0.0
        %506 = vmatpush.msra.mxu0 0.0
        %507 = vmatpush.msra.mxu0 0.0
        %508 = vmatpush.msra.mxu0 0.0
        %509 = vmatpush.msra.mxu0 0.0
        %510 = vmatpush.msra.mxu0 %v489
        %511 = vmatpush.msra.mxu0 %v488
        %512 = vmatpush.msra.mxu0 %v487
        %513 = vmatpush.msra.mxu0 %v486
        %514 = vmatmul.f32.gmra.mxu0 %v496
        %v515 = vpop.f32.mrf.mxu0
        %v516 = vadd.f32 %v492, %v515
        %517 = vdwg.mxu0
        %v519 = vperm.slane %v484, 0
        %v521 = vmul.f32 %v516, %v519
        %v522 = vadd.f32 %v485, %v521
        %v523 = vld [vmem:[%s483] sm:$0xff]
        %v524 = vld [vmem:[%s483 + $0x8] sm:$0xff]
        %v526 = vsel %vm494, %v523, 0
        %v529 = vsel %vm494, %v524, 0
        %531 = vmatpush.msra.mxu0 0.0
        %532 = vmatpush.msra.mxu0 0.0
        %533 = vmatpush.msra.mxu0 0.0
        %534 = vmatpush.msra.mxu0 0.0
        %535 = vmatpush.msra.mxu0 0.0
        %536 = vmatpush.msra.mxu0 0.0
        %537 = vmatpush.msra.mxu0 0.0
        %538 = vmatpush.msra.mxu0 0.0
        %539 = vmatpush.msra.mxu0 0.0
        %540 = vmatpush.msra.mxu0 0.0
        %541 = vmatpush.msra.mxu0 0.0
        %542 = vmatpush.msra.mxu0 0.0
        %543 = vmatpush.msra.mxu0 %v489
        %544 = vmatpush.msra.mxu0 %v488
        %545 = vmatpush.msra.mxu0 %v487
        %546 = vmatpush.msra.mxu0 %v486
        %547 = vmatmul.f32.gmra.mxu0 %v526
        %v548 = vpop.f32.mrf.mxu0
        %v549 = vadd.f32 %v492, %v548
        %550 = vmatmul.f32.gmra.mxu0 %v529
        %v551 = vpop.f32.mrf.mxu0
        %v552 = vadd.f32 %v492, %v551
        %553 = vdwg.mxu0
        %v554 = vmul.f32 %v549, %v519
        %v555 = vmul.f32 %v552, %v519
        %v556 = vadd.f32 %v523, %v554
        %v557 = vadd.f32 %v524, %v555
        %558 = vst.msk [vmem:[#allocation2] sm:$0xff] %vm494, 0.0
        loop: start=0, step=1, limit=4
        $region73: #{tpu_custom_call.1} parent=71 // loop_pre_header
          _
        $region74: #{tpu_custom_call.1} parent=71 // loop_header
          %s560 = sphi 0, %s564
          %p561 = scmp.ge.s32.totalorder %s560, 4
        $region75: #{tpu_custom_call.1} parent=71 // loop_header_branch
          %563 = sbr.rel (%p561) target = $region79
        $region76: #{tpu_custom_call.1} parent=71 // loop_body
          %s565 = smul.u32 %s560, 32
          %s566 = scalar_lea.vmem %s5, %s565
          %v567 = vld [vmem:[%s566] sm:$0xff]
          %v568 = vld [vmem:[%s566 + $0x8] sm:$0xff]
          %v569 = vld [vmem:[%s566 + $0x10] sm:$0xff]
          %v570 = vld [vmem:[%s566 + $0x18] sm:$0xff]
          %s571 = scalar_lea.vmem %s8, %s560
          %v572 = vld [vmem:[%s571] sm:$0x1]
          %v574 = vperm.slane %v572, 0
          %v577 = vsel %vm494, %v522, 0
          %579 = vmatpush.msra.mxu0 0.0
          %580 = vmatpush.msra.mxu0 0.0
          %581 = vmatpush.msra.mxu0 0.0
          %582 = vmatpush.msra.mxu0 0.0
          %583 = vmatpush.msra.mxu0 0.0
          %584 = vmatpush.msra.mxu0 0.0
          %585 = vmatpush.msra.mxu0 0.0
          %586 = vmatpush.msra.mxu0 0.0
          %587 = vmatpush.msra.mxu0 0.0
          %588 = vmatpush.msra.mxu0 0.0
          %589 = vmatpush.msra.mxu0 0.0
          %590 = vmatpush.msra.mxu0 0.0
          %591 = vmatpush.msra.mxu0 %v570
          %592 = vmatpush.msra.mxu0 %v569
          %593 = vmatpush.msra.mxu0 %v568
          %594 = vmatpush.msra.mxu0 %v567
          %595 = vmatmul.f32.gmra.mxu0 %v577
          %v596 = vpop.f32.mrf.mxu0
          %v597 = vadd.f32 %v574, %v596
          %598 = vdwg.mxu0
          %s599 = scalar_lea.vmem %s6, %s565
          %v600 = vld [vmem:[%s599] sm:$0xff]
          %v601 = vld [vmem:[%s599 + $0x8] sm:$0xff]
          %v602 = vld [vmem:[%s599 + $0x10] sm:$0xff]
          %v603 = vld [vmem:[%s599 + $0x18] sm:$0xff]
          %s604 = scalar_lea.vmem %s9, %s560
          %v605 = vld [vmem:[%s604] sm:$0x1]
          %v607 = vperm.slane %v605, 0
          %v610 = vsel %vm494, %v556, 0
          %v613 = vsel %vm494, %v557, 0
          %615 = vmatpush.msra.mxu0 0.0
          %616 = vmatpush.msra.mxu0 0.0
          %617 = vmatpush.msra.mxu0 0.0
          %618 = vmatpush.msra.mxu0 0.0
          %619 = vmatpush.msra.mxu0 0.0
          %620 = vmatpush.msra.mxu0 0.0
          %621 = vmatpush.msra.mxu0 0.0
          %622 = vmatpush.msra.mxu0 0.0
          %623 = vmatpush.msra.mxu0 0.0
          %624 = vmatpush.msra.mxu0 0.0
          %625 = vmatpush.msra.mxu0 0.0
          %626 = vmatpush.msra.mxu0 0.0
          %627 = vmatpush.msra.mxu0 %v603
          %628 = vmatpush.msra.mxu0 %v602
          %629 = vmatpush.msra.mxu0 %v601
          %630 = vmatpush.msra.mxu0 %v600
          %631 = vmatmul.f32.gmra.mxu0 %v610
          %v632 = vpop.f32.mrf.mxu0
          %v633 = vadd.f32 %v607, %v632
          %634 = vmatmul.f32.gmra.mxu0 %v613
          %v635 = vpop.f32.mrf.mxu0
          %v636 = vadd.f32 %v607, %v635
          %637 = vdwg.mxu0
          %s638 = scalar_lea.vmem %s7, %s565
          %v639 = vld [vmem:[%s638] sm:$0xff]
          %v640 = vld [vmem:[%s638 + $0x8] sm:$0xff]
          %v641 = vld [vmem:[%s638 + $0x10] sm:$0xff]
          %v642 = vld [vmem:[%s638 + $0x18] sm:$0xff]
          %s643 = scalar_lea.vmem %s10, %s560
          %v644 = vld [vmem:[%s643] sm:$0x1]
          %v646 = vperm.slane %v644, 0
          %648 = vmatpush.msra.mxu0 0.0
          %649 = vmatpush.msra.mxu0 0.0
          %650 = vmatpush.msra.mxu0 0.0
          %651 = vmatpush.msra.mxu0 0.0
          %652 = vmatpush.msra.mxu0 0.0
          %653 = vmatpush.msra.mxu0 0.0
          %654 = vmatpush.msra.mxu0 0.0
          %655 = vmatpush.msra.mxu0 0.0
          %656 = vmatpush.msra.mxu0 0.0
          %657 = vmatpush.msra.mxu0 0.0
          %658 = vmatpush.msra.mxu0 0.0
          %659 = vmatpush.msra.mxu0 0.0
          %660 = vmatpush.msra.mxu0 %v642
          %661 = vmatpush.msra.mxu0 %v641
          %662 = vmatpush.msra.mxu0 %v640
          %663 = vmatpush.msra.mxu0 %v639
          %664 = vmatmul.f32.gmra.mxu0 %v610
          %v665 = vpop.f32.mrf.mxu0
          %v666 = vadd.f32 %v646, %v665
          %667 = vmatmul.f32.gmra.mxu0 %v613
          %v668 = vpop.f32.mrf.mxu0
          %v669 = vadd.f32 %v646, %v668
          %670 = vdwg.mxu0
          %vm671 = vcmask 64512
          %v673 = vsel %vm671, %v597, 0
          %v676 = vsel %vm671, %v633, 0
          %v679 = vsel %vm671, %v636, 0
          %681 = vmatpush.xpose.msra.mxu0 0.0
          %682 = vmatpush.xpose.msra.mxu0 0.0
          %683 = vmatpush.xpose.msra.mxu0 0.0
          %684 = vmatpush.xpose.msra.mxu0 0.0
          %685 = vmatpush.xpose.msra.mxu0 0.0
          %686 = vmatpush.xpose.msra.mxu0 0.0
          %687 = vmatpush.xpose.msra.mxu0 0.0
          %688 = vmatpush.xpose.msra.mxu0 0.0
          %689 = vmatpush.xpose.msra.mxu0 0.0
          %690 = vmatpush.xpose.msra.mxu0 0.0
          %691 = vmatpush.xpose.msra.mxu0 0.0
          %692 = vmatpush.xpose.msra.mxu0 0.0
          %693 = vmatpush.xpose.msra.mxu0 0.0
          %694 = vmatpush.xpose.msra.mxu0 0.0
          %695 = vmatpush.xpose.msra.mxu0 %v679
          %696 = vmatpush.xpose.msra.mxu0 %v676
          %697 = vmatmul.f32.gmra.mxu0 %v673
          %v698 = vpop.f32.mrf.mxu0
          %v699 = vadd.f32 0.0, %v698
          %700 = vdwg.mxu0
          %v701 = vmul.f32 %v699, 0.35355338
          %vm702 = vcmask 130048
          %v703 = vsel %vm702, %v701, -inf
          %704 = vmax.xlane.f32.xlu0 %v703
          %v705 = vpop.xlane.xlu0 %704
          %v706 = vsub.f32 %v701, %v705
          %v707 = vmul.f32 %v706, 1.442695
          %v708 = vpow.pop %v707
          %v709 = vsel %vm702, %v708, 0.0
          %710 = vadd.xlane.f32.xlu0 %v709
          %v711 = vpop.xlane.xlu0 %710
          %v712 = vrcp.pop %v711
          %v713 = vmul.f32 %v708, %v712
          %v715 = vsel %vm702, %v713, 0
          %717 = vmatpush.msra.mxu0 0.0
          %718 = vmatpush.msra.mxu0 0.0
          %719 = vmatpush.msra.mxu0 0.0
          %720 = vmatpush.msra.mxu0 0.0
          %721 = vmatpush.msra.mxu0 0.0
          %722 = vmatpush.msra.mxu0 0.0
          %723 = vmatpush.msra.mxu0 0.0
          %724 = vmatpush.msra.mxu0 0.0
          %725 = vmatpush.msra.mxu0 0.0
          %726 = vmatpush.msra.mxu0 0.0
          %727 = vmatpush.msra.mxu0 0.0
          %728 = vmatpush.msra.mxu0 0.0
          %729 = vmatpush.msra.mxu0 0.0
          %730 = vmatpush.msra.mxu0 0.0
          %731 = vmatpush.msra.mxu0 %v669
          %732 = vmatpush.msra.mxu0 %v666
          %733 = vmatmul.f32.gmra.mxu0 %v715
          %v734 = vpop.f32.mrf.mxu0
          %v735 = vadd.f32 0.0, %v734
          %736 = vdwg.mxu0
          %v737 = vld [vmem:[#allocation2] sm:$0xff]
          %s738 = smul.u32 %s560, 8
          %s739 = scalar_lea.vmem %s11, %s738
          %v740 = vld [vmem:[%s739] sm:$0xff]
          %v742 = vsel %vm671, %v735, 0
          %744 = vmatpush.msra.mxu0 0.0
          %745 = vmatpush.msra.mxu0 0.0
          %746 = vmatpush.msra.mxu0 0.0
          %747 = vmatpush.msra.mxu0 0.0
          %748 = vmatpush.msra.mxu0 0.0
          %749 = vmatpush.msra.mxu0 0.0
          %750 = vmatpush.msra.mxu0 0.0
          %751 = vmatpush.msra.mxu0 0.0
          %752 = vmatpush.msra.mxu0 0.0
          %753 = vmatpush.msra.mxu0 0.0
          %754 = vmatpush.msra.mxu0 0.0
          %755 = vmatpush.msra.mxu0 0.0
          %756 = vmatpush.msra.mxu0 0.0
          %757 = vmatpush.msra.mxu0 0.0
          %758 = vmatpush.msra.mxu0 0.0
          %759 = vmatpush.msra.mxu0 %v740
          %760 = vmatmul.f32.gmra.mxu0 %v742
          %v761 = vpop.f32.mrf.mxu0
          %v762 = vadd.f32 0.0, %v761
          %763 = vdwg.mxu0
          %v764 = vadd.f32 %v737, %v762
          %765 = vst.msk [vmem:[#allocation2] sm:$0xff] %vm494, %v764
        $region77: #{tpu_custom_call.1} parent=71 // loop_footer
          %s564 = sadd.s32 1, %s560
        $region78: #{tpu_custom_call.1} parent=71 // loop_footer_branch
          %559 = sbr.rel target = $region74
        $region79: #{tpu_custom_call.1} parent=71 // loop_exit
          _
        %v766 = vld [vmem:[#allocation2] sm:$0xff]
        %v767 = vld [vmem:[%s12] sm:$0x1]
        %v769 = vperm.slane %v767, 0
        %v771 = vadd.f32 %v766, %v769
        %772 = vst.msk [vmem:[%s470] sm:$0xff] %vm494, %v771
        %s773 = sand.u32 %s334, 1
        %s774 = scalar_lea.sflag [#allocation4], %s773
        %s775 = sand.u32 %s334, 1
        %s776 = smul.addr %s775, 8
        %s777 = scalar_lea.vmem [#allocation3], %s776
        // Predicated region
        $region80: #{tpu_custom_call.1} parent=71 // pred_check
          %p778 = pneg %p344
        $region81: #{tpu_custom_call.1} parent=71 // pred_check_branch
          %780 = sbr.rel (%p778) target = $region83
        $region82: #{tpu_custom_call.1} parent=71 // pred_region
          %782 = vsyncadd %s774, 0
          %s783 = smul.addr %s31, 2
          %s784 = sadd.s32 %s32, %s783
          %s785 = smul.addr %s784, 8
          %s786 = scalar_lea.hbm %s13, %s785
          %s788 = sshll.u32 %s777, 4
          %s789 = int_to_ptr.vmem [resolvable:$true] %s788
          %s790 = sshll.u32 %s786, 4
          %s791 = int_to_ptr.hbm [resolvable:$true] %s790
          %793 = dma.vmem_to_hbm [thread:$0]  %s789, 128, %s791, %s774
        $region83: #{tpu_custom_call.1} parent=71 // pred_fallthru
          _
      $region72: #{tpu_custom_call.1} parent=5 // pred_fallthru
        _
      %p794 = scmp.le.s32.totalorder 2, %s22
      // Predicated region
      $region84: #{tpu_custom_call.1} parent=5 // pred_check
        %p795 = pneg %p794
      $region85: #{tpu_custom_call.1} parent=5 // pred_check_branch
        %797 = sbr.rel (%p795) target = $region87
      $region86: #{tpu_custom_call.1} parent=5 // pred_region
        %s798 = ssub.s32 %s22, 2
        // Predicated region
        $region88: #{tpu_custom_call.1} parent=86 // pred_check
          %p799 = pneg %p350
        $region89: #{tpu_custom_call.1} parent=86 // pred_check_branch
          %801 = sbr.rel (%p799) target = $region91
        $region90: #{tpu_custom_call.1} parent=86 // pred_region
          %s802 = sand.u32 %s335, 1
          %s803 = scalar_lea.sflag [#allocation4], %s802
          %s804 = sand.u32 %s335, 1
          %s805 = smul.addr %s804, 8
          %s806 = scalar_lea.vmem [#allocation3], %s805
          %808 = dma.done %s803, 128
        $region91: #{tpu_custom_call.1} parent=86 // pred_fallthru
          _
      $region87: #{tpu_custom_call.1} parent=5 // pred_fallthru
        _
    $region6: #{tpu_custom_call.1} parent=1 // loop_footer
      %s26 = sadd.s32 1, %s22
    $region7: #{tpu_custom_call.1} parent=1 // loop_footer_branch
      %21 = sbr.rel target = $region3
    $region8: #{tpu_custom_call.1} parent=1 // loop_exit
      _
    %809 = vsyncpa [#allocation4], 1
    %s810 = scalar_lea.sflag [#allocation4], 1
    %811 = vsyncpa %s810, 1

</llo_original>
